<compile_context>
chip_gen: v5e
topology: v5e:2x2
jax: 0.10.0
libtpu: 0.0.40
codegen_flags: <defaults>
</compile_context>

<pallas_src>
import numpy as np
import jax
import jax.numpy as jnp
from jax.experimental import pallas as pl
from jax.experimental.pallas import tpu as pltpu


# ---------------------------------------------------------------------------
# pltpu.roll convention probe (portability guard, run once before tracing)
# ---------------------------------------------------------------------------

# True  => pltpu.roll matches np.roll: out[i] = x[(i - shift) mod N]
_ROLL_MATCHES_NP = True


def probe_roll_convention():
    """Pin the Mosaic lane-rotate convention with a tiny one-shot kernel."""
    global _ROLL_MATCHES_NP

    def k(x_ref, o_ref):
        o_ref[...] = pltpu.roll(x_ref[...], 1, axis=1)

    x = jnp.tile(jnp.arange(128, dtype=jnp.float32)[None, :], (8, 1))
    y = pl.pallas_call(k, out_shape=jax.ShapeDtypeStruct((8, 128), jnp.float32))(x)
    _ROLL_MATCHES_NP = bool(abs(float(y[0, 0]) - 127.0) < 0.5)
    return _ROLL_MATCHES_NP


# ---------------------------------------------------------------------------
# packed small-weight layout (all segment starts on an 8-row sublane boundary)
# ---------------------------------------------------------------------------

def _wsmall_layout(Cl):
    Cq = Cl // 4
    segs = (('dec', 4 * Cl, 0),          # deconv bias only (bias lane)
            ('c1', 4 * Cq, 4 * Cl),      # kron(I4, Wc1) block-diag
            ('c2', 4 * Cl, 4 * Cq),      # kron(I4, Wc2) block-diag
            ('g1', Cq, Cl), ('g2', Cl, Cq),
            ('a1', Cq, Cl), ('a2', Cl, Cq))
    lay, off = {}, 0
    for name, rows, cols in segs:
        lay[name] = (off, rows, cols)
        off += ((rows + 7) // 8) * 8     # pad each segment to 8 rows
    return lay, off


# ---------------------------------------------------------------------------
# Pallas kernel
# ---------------------------------------------------------------------------

def _make_pafm_kernel(Ch, Cl, Hh, Wh, shifts, compute_dtype):
    """One batch element per grid step.  Working layout is channel-major:
    rows (sublanes) = (phase, channel), lanes = flattened half-res spatial."""
    del Ch  # shapes come from the refs
    f32 = jnp.float32
    cd = compute_dtype
    S = Hh * Wh
    bh, bw = Hh // 4, Wh // 4
    inv_bin = 1.0 / (4 * bh * bw)
    lay, _ = _wsmall_layout(Cl)
    KW = 4 * Cl                               # bias lane index in wsmall
    sh01, sh10, sh11 = shifts                 # lane shifts fetching x[s + d]

    def kernel(xhigh_ref, xlow_ref, wdec_ref, wsmall_ref, consts_ref,
               poolmat_ref, out_ref):
        xhi = xhigh_ref[0]                    # (Ch, S)   compute dtype
        xlow = xlow_ref[0]                    # (4*Cl, S) f32 (never cast)
        ws = wsmall_ref[...]                  # (R, 4*Cl+1) f32
        poolmat = poolmat_ref[...]            # (S, 16)   compute dtype
        m01 = consts_ref[1:2, :]              # right-edge mask  (1, S)
        m10 = consts_ref[2:3, :]              # bottom-edge mask
        m11 = consts_ref[3:4, :]              # corner mask
        expmat = consts_ref[8:24, :]          # (16, S) nearest-upsample matrix

        def seg(name):
            o, n, k = lay[name]
            return ws[o:o + n, 0:k], ws[o:o + n, KW:KW + 1]

        Wc1, bc1 = seg('c1'); Wc2, bc2 = seg('c2')
        Wg1, bg1 = seg('g1'); Wg2, bg2 = seg('g2')
        Wa1, ba1 = seg('a1'); Wa2, ba2 = seg('a2')
        do = lay['dec'][0]
        bdec = ws[do:do + 4 * Cl, KW:KW + 1]

        # ---- ConvTranspose2d(3, s=2, p=1, op=1): 2x2 sub-pixel neighbours
        #      built in-register with lane rolls (XLU); 4 phase-decomposed dots.
        xhi32 = xhi.astype(f32)               # roll in f32 (widest HW support)
        n01 = pltpu.roll(xhi32, sh01, axis=1).astype(cd) * m01   # x[p, q+1]
        n10 = pltpu.roll(xhi32, sh10, axis=1).astype(cd) * m10   # x[p+1, q]
        n11 = pltpu.roll(xhi32, sh11, axis=1).astype(cd) * m11   # x[p+1, q+1]
        xh = (jnp.dot(wdec_ref[0], xhi, preferred_element_type=f32)
              + jnp.dot(wdec_ref[1], n01, preferred_element_type=f32)
              + jnp.dot(wdec_ref[2], n10, preferred_element_type=f32)
              + jnp.dot(wdec_ref[3], n11, preferred_element_type=f32)
              + bdec)                         # (4*Cl, S) f32
        xs = xh + xlow                        # (4*Cl, S) f32

        # ---- per-pixel gate: block-diag 1x1 convs (eval-BN folded),
        #      bf16 MXU feeds on both sides, f32 accumulation.
        xs_c = xs.astype(cd)
        h1 = jnp.maximum(
            jnp.dot(Wc1.astype(cd), xs_c, preferred_element_type=f32) + bc1, 0.0)
        # NOTE(v6e/v7x): the logits could be cast bf16 before the sigmoid to
        # relieve the single EUP; kept f32 because v5e has no bf16 EUP.
        xc = jax.nn.sigmoid(
            jnp.dot(Wc2.astype(cd), h1.astype(cd), preferred_element_type=f32) + bc2)

        # ---- AdaptiveAvgPool2d(4)/(1): precomputed 0/1 bin matrix ------------
        pool_raw = jnp.dot(xh.astype(cd), poolmat, preferred_element_type=f32)
        a_pool = (pool_raw[0:Cl] + pool_raw[Cl:2 * Cl] + pool_raw[2 * Cl:3 * Cl]
                  + pool_raw[3 * Cl:4 * Cl]) * inv_bin            # (Cl, 16)
        g_in = jnp.broadcast_to(jnp.mean(a_pool, axis=1, keepdims=True), (Cl, 16))

        # ---- tiny GAP / AAP MLPs (16 lanes): kept f32 ------------------------
        g1 = jnp.maximum(jnp.dot(Wg1, g_in, preferred_element_type=f32) + bg1, 0.0)
        g2 = jnp.dot(Wg2, g1, preferred_element_type=f32) + bg2
        a1 = jnp.maximum(jnp.dot(Wa1, a_pool, preferred_element_type=f32) + ba1, 0.0)
        a2 = jnp.dot(Wa2, a1, preferred_element_type=f32) + ba2
        gate = jax.nn.sigmoid(g2 + a2)                            # (Cl, 16)

        # ---- nearest upsample of the 4x4 gate + fused per-phase stores -------
        p_full = jnp.dot(gate.astype(cd), expmat, preferred_element_type=f32)  # (Cl, S)
        for ph in range(4):
            sl = slice(ph * Cl, (ph + 1) * Cl)
            out_ref[0, sl, :] = (xc[sl] * xs[sl] * p_full).astype(out_ref.dtype)

    return kernel


# ---------------------------------------------------------------------------
# glue: layout plumbing + parameter folding / packing
# ---------------------------------------------------------------------------

def _phase_split_nchw(x):
    """(N, C, 2*Hh, 2*Wh) NCHW -> (N, 4*C, Hh*Wh), rows ordered (di, dj, c)."""
    N, C, H, W = x.shape
    Hh, Wh = H // 2, W // 2
    x = x.reshape(N, C, Hh, 2, Wh, 2)
    x = jnp.transpose(x, (0, 3, 5, 1, 2, 4))           # (N, di, dj, C, p, q)
    return x.reshape(N, 4 * C, Hh * Wh)


def _phase_merge_to_nchw(y, C, Hh, Wh):
    """(N, 4*C, Hh*Wh) with rows (di, dj, c) -> (N, C, 2*Hh, 2*Wh) NCHW."""
    N = y.shape[0]
    y = y.reshape(N, 2, 2, C, Hh, Wh)
    y = jnp.transpose(y, (0, 3, 4, 1, 5, 2))           # (N, C, p, di, q, dj)
    return y.reshape(N, C, 2 * Hh, 2 * Wh)


def init_params(key, Ch, Cl):
    """Random parameters in PyTorch layout (ConvTranspose2d weight (Cin,Cout,3,3),
    1x1 convs as (Cout,Cin), eval-mode BatchNorm running stats)."""
    Cq = Cl // 4
    kit = iter(jax.random.split(key, 40))

    def rn(shape, scale=0.2):
        return scale * jax.random.normal(next(kit), shape, jnp.float32)

    def bn(c):
        return (1.0 + rn((c,), 0.1),           # gamma
                rn((c,), 0.1),                 # beta
                rn((c,), 0.1),                 # running_mean
                jnp.abs(rn((c,), 0.5)) + 0.5)  # running_var

    return {
        'dconv_w': rn((Ch, Cl, 3, 3)), 'dconv_b': rn((Cl,)),
        'c1_w': rn((Cq, Cl)), 'c1_b': rn((Cq,)), 'c1_bn': bn(Cq),
        'c2_w': rn((Cl, Cq)), 'c2_b': rn((Cl,)), 'c2_bn': bn(Cl),
        'g1_w': rn((Cq, Cl)), 'g1_b': rn((Cq,)), 'g1_bn': bn(Cq),
        'g2_w': rn((Cl, Cq)), 'g2_b': rn((Cl,)), 'g2_bn': bn(Cl),
        'a1_w': rn((Cq, Cl)), 'a1_b': rn((Cq,)), 'a1_bn': bn(Cq),
        'a2_w': rn((Cl, Cq)), 'a2_b': rn((Cl,)), 'a2_bn': bn(Cl),
    }


def pack_params(raw):
    """Fold eval-mode BN into the 1x1 convs, build the per-neighbour sub-pixel
    deconv blocks, and pack the small weights + ALL biases into one buffer."""
    Wt = np.asarray(raw['dconv_w'], np.float32)          # (Ch, Cl, 3, 3)
    Ch, Cl = Wt.shape[0], Wt.shape[1]

    def fold(Wk, bk, prm):                               # W: (Cout, Cin)
        g, bt, m, v = (np.asarray(t, np.float32) for t in prm)
        Wk = np.asarray(Wk, np.float32)
        bk = np.asarray(bk, np.float32)
        s = g / np.sqrt(v + 1e-5)
        return Wk * s[:, None], s * (bk - m) + bt

    Wc1, bc1 = fold(raw['c1_w'], raw['c1_b'], raw['c1_bn'])
    Wc2, bc2 = fold(raw['c2_w'], raw['c2_b'], raw['c2_bn'])
    Wg1, bg1 = fold(raw['g1_w'], raw['g1_b'], raw['g1_bn'])
    Wg2, bg2 = fold(raw['g2_w'], raw['g2_b'], raw['g2_bn'])
    Wa1, ba1 = fold(raw['a1_w'], raw['a1_b'], raw['a1_bn'])
    Wa2, ba2 = fold(raw['a2_w'], raw['a2_b'], raw['a2_bn'])

    # Sub-pixel ConvTranspose2d: output phase (di,dj) at half-res pixel (p,q)
    # reads neighbour x[p+a, q+b] through tap (kh,kw)=(di+1-2a, dj+1-2b).
    # One (4*Cl, Ch) block per neighbour k = 2a+b.
    wdec = np.zeros((4, 4 * Cl, Ch), np.float32)
    for a in range(2):
        for b in range(2):
            for di in range(2):
                for dj in range(2):
                    kh, kw = di + 1 - 2 * a, dj + 1 - 2 * b
                    if 0 <= kh <= 2 and 0 <= kw <= 2:
                        ph = 2 * di + dj
                        wdec[2 * a + b, ph * Cl:(ph + 1) * Cl, :] = Wt[:, :, kh, kw].T

    lay, R = _wsmall_layout(Cl)
    KW = 4 * Cl
    wsmall = np.zeros((R, KW + 1), np.float32)           # biases live in lane KW

    def put(name, Wseg, bseg):
        o, n, k = lay[name]
        if Wseg is not None:
            wsmall[o:o + n, 0:k] = Wseg
        wsmall[o:o + n, KW] = bseg

    eye4 = np.eye(4, dtype=np.float32)
    put('dec', None, np.tile(np.asarray(raw['dconv_b'], np.float32), 4))
    put('c1', np.kron(eye4, Wc1), np.tile(bc1, 4))       # block-diag over phases
    put('c2', np.kron(eye4, Wc2), np.tile(bc2, 4))
    put('g1', Wg1, bg1)
    put('g2', Wg2, bg2)
    put('a1', Wa1, ba1)
    put('a2', Wa2, ba2)

    return {'wdec': jnp.asarray(wdec), 'wsmall': jnp.asarray(wsmall)}


# ---------------------------------------------------------------------------
# public wrapper
# ---------------------------------------------------------------------------

def pafm_forward(x_high, x_low, packed, compute_dtype=jnp.bfloat16):
    """x_high: (N, Ch, H/2, W/2), x_low: (N, Cl, H, W) NCHW -> (N, Cl, H, W)."""
    N, Ch, Hh, Wh = x_high.shape
    Nl, Cl, H, W = x_low.shape
    assert N == Nl and H == 2 * Hh and W == 2 * Wh
    assert H == W and Hh % 4 == 0 and Wh % 4 == 0   # equal AAP(4) bins / integer NN factor
    S = Hh * Wh
    cd = compute_dtype

    # x_high: contiguous NCHW flatten (free reshape); neighbours built in-kernel.
    xhi = x_high.reshape(N, Ch, S).astype(cd)
    # x_low stays f32: it only feeds an add, never the MXU (review fidelity note).
    # NOTE: the phase split / merge are the remaining wrapper HBM passes; keep the
    # phase-split (4*C, S) layout end-to-end across adjacent layers where possible.
    xlow = _phase_split_nchw(x_low).astype(jnp.float32)

    wdec = packed['wdec'].astype(cd)                  # bf16 MXU feed
    wsmall = packed['wsmall']                         # f32; weights cast per-dot in kernel

    # Host-side constants (built once, not per grid step): roll edge masks and
    # the AdaptiveAvgPool2d(4) bin / nearest-upsample 0-1 matrices.
    bh, bw = Hh // 4, Wh // 4
    s = np.arange(S)
    p, q = s // Wh, s % Wh
    bins = (p // bh) * 4 + (q // bw)
    poolmat_np = (bins[:, None] == np.arange(16)[None, :]).astype(np.float32)  # (S, 16)
    consts_np = np.zeros((24, S), np.float32)
    consts_np[1] = (q != Wh - 1)                      # right-edge mask
    consts_np[2] = (p != Hh - 1)                      # bottom-edge mask
    consts_np[3] = consts_np[1] * consts_np[2]        # corner mask
    consts_np[8:24] = poolmat_np.T                    # nearest-upsample matrix
    consts = jnp.asarray(consts_np, dtype=cd)
    poolmat = jnp.asarray(poolmat_np, dtype=cd)

    # lane shift amounts that fetch x[s + delta] under the probed roll convention
    if _ROLL_MATCHES_NP:
        shifts = (S - 1, S - Wh, S - Wh - 1)
    else:
        shifts = (1, Wh, Wh + 1)

    kernel = _make_pafm_kernel(Ch, Cl, Hh, Wh, shifts, cd)

    # Grid over batch only ("parallel"): at small N the per-step overhead is
    # amortizable by blocking Nb>1 batches per step; left as-is for clarity.
    out = pl.pallas_call(
        kernel,
        out_shape=jax.ShapeDtypeStruct((N, 4 * Cl, S), cd),     # compute-dtype output stream
        grid=(N,),
        in_specs=[
            pl.BlockSpec((1, Ch, S), lambda b: (b, 0, 0)),
            pl.BlockSpec((1, 4 * Cl, S), lambda b: (b, 0, 0)),
            pl.BlockSpec(wdec.shape, lambda b: (0, 0, 0)),
            pl.BlockSpec(wsmall.shape, lambda b: (0, 0)),
            pl.BlockSpec(consts.shape, lambda b: (0, 0)),
            pl.BlockSpec(poolmat.shape, lambda b: (0, 0)),
        ],
        out_specs=pl.BlockSpec((1, 4 * Cl, S), lambda b: (b, 0, 0)),
        compiler_params=pltpu.CompilerParams(dimension_semantics=("parallel",)),
    )(xhi, xlow, wdec, wsmall, consts, poolmat)

    return _phase_merge_to_nchw(out, Cl, Hh, Wh)


# ---------------------------------------------------------------------------
# independent reference of the PyTorch forward (eval-mode BN, raw params)
# ---------------------------------------------------------------------------

def _conv_transpose2d_ref(x, Wt, b, out_h, out_w):
    """Direct scatter definition of ConvTranspose2d(k=3, stride=2, padding=1)."""
    N, Ci, Hh, Wh = x.shape
    Co = Wt.shape[1]
    stride, pad = 2, 1
    full = jnp.zeros((N, Co, (Hh - 1) * stride + 3, (Wh - 1) * stride + 3), jnp.float32)
    contrib = jnp.einsum('nihw,iokl->noklhw', x, Wt, precision='highest')
    for kh in range(3):
        for kw in range(3):
            full = full.at[:, :, kh:kh + (Hh - 1) * stride + 1:stride,
                           kw:kw + (Wh - 1) * stride + 1:stride].add(contrib[:, :, kh, kw])
    return full[:, :, pad:pad + out_h, pad:pad + out_w] + b[None, :, None, None]


def pafm_reference(x_high, x_low, raw):
    N, Cl, H, W = x_low.shape

    def conv1x1(x, W, b):
        return jnp.einsum('oc,nchw->nohw', W, x, precision='highest') + b[None, :, None, None]

    def bn(x, prm):
        g, bt, m, v = prm
        s = g / jnp.sqrt(v + 1e-5)
        return (x - m[None, :, None, None]) * s[None, :, None, None] + bt[None, :, None, None]

    xh = _conv_transpose2d_ref(x_high, raw['dconv_w'], raw['dconv_b'], H, W)
    xs = xh + x_low
    h = jax.nn.relu(bn(conv1x1(xs, raw['c1_w'], raw['c1_b']), raw['c1_bn']))
    xc = jax.nn.sigmoid(bn(conv1x1(h, raw['c2_w'], raw['c2_b']), raw['c2_bn']))

    gp = jnp.mean(xh, axis=(2, 3), keepdims=True)                        # GAP -> (N,Cl,1,1)
    g = bn(conv1x1(jax.nn.relu(bn(conv1x1(gp, raw['g1_w'], raw['g1_b']), raw['g1_bn'])),
                   raw['g2_w'], raw['g2_b']), raw['g2_bn'])
    ap = xh.reshape(N, Cl, 4, H // 4, 4, W // 4).mean(axis=(3, 5))       # AAP(4)
    a = bn(conv1x1(jax.nn.relu(bn(conv1x1(ap, raw['a1_w'], raw['a1_b']), raw['a1_bn'])),
                   raw['a2_w'], raw['a2_b']), raw['a2_bn'])
    p = jax.nn.sigmoid(g + a)                                            # (N,Cl,4,4)
    p_full = jnp.repeat(jnp.repeat(p, H // 4, axis=2), W // 4, axis=3)   # nearest x(h//4)
    return xc * xs * p_full


if __name__ == "__main__":
    N, Ch, Cl = 2, 8, 8          # channels_high=8, channels_low=8 (Cq = 2)
    Hh = Wh = 16                 # x_high spatial -> x_low spatial is 32x32
    H, W = 2 * Hh, 2 * Wh

    key = jax.random.PRNGKey(0)
    k1, k2, k3 = jax.random.split(key, 3)
    x_high = jax.random.normal(k1, (N, Ch, Hh, Wh), jnp.float32)
    x_low = jax.random.normal(k2, (N, Cl, H, W), jnp.float32)

    raw = init_params(k3, Ch, Cl)
    packed = pack_params(raw)

    probe_roll_convention()      # pin the pltpu.roll convention before tracing

    fwd = jax.jit(pafm_forward, static_argnames=("compute_dtype",))

    # primary run: bf16 MXU operands + bf16 output stream, f32 accumulation
    out_bf16 = jax.block_until_ready(fwd(x_high, x_low, packed, compute_dtype=jnp.bfloat16))
    assert out_bf16.shape == (N, Cl, H, W)

    # validate against an independent NCHW reference of the PyTorch forward
    ref = jax.block_until_ready(pafm_reference(x_high, x_low, raw))
    out_f32 = jax.block_until_ready(fwd(x_high, x_low, packed, compute_dtype=jnp.float32))

    np.testing.assert_allclose(np.asarray(out_f32), np.asarray(ref), rtol=1e-3, atol=1e-3)
    np.testing.assert_allclose(np.asarray(out_bf16.astype(jnp.float32)), np.asarray(ref),
                               rtol=8e-2, atol=8e-2)

    print("KERNEL_OK")
</pallas_src>

<mosaic_0001>
module attributes {stable_mosaic.version = 11 : i64} {
  func.func @k(%arg0: memref<8x128xf32, #tpu.memory_space<vmem>>, %arg1: memref<8x128xf32, #tpu.memory_space<vmem>>) attributes {dimension_semantics = [], scalar_prefetch = 0 : i64, scratch_operands = 0 : i64, tpu.core_type = #tpu.core_type<tc>} {
    %c0 = arith.constant 0 : index
    %c0_0 = arith.constant 0 : index
    %0 = vector.load %arg0[%c0, %c0_0] : memref<8x128xf32, #tpu.memory_space<vmem>>, vector<8x128xf32>
    %c1_i32 = arith.constant 1 : i32
    %1 = tpu.dynamic_rotate %0 by %c1_i32 dim 1 : vector<8x128xf32>, i32 -> vector<8x128xf32>
    %c0_1 = arith.constant 0 : index
    %c0_2 = arith.constant 0 : index
    %2 = vector.load %arg1[%c0_1, %c0_2] : memref<8x128xf32, #tpu.memory_space<vmem>>, vector<8x128xf32>
    tpu.vector_store %arg1[%c0_1, %c0_2], %1 {strides = array<i32>} : memref<8x128xf32, #tpu.memory_space<vmem>>, vector<8x128xf32>,
    return
  }
}

</mosaic_0001>

<llo_original>
// kernel: tpu_custom_call.1
$region0: #{tpu_custom_call.1}
  #allocation0 [shape = 'u32[]', space=smem, size = 0x4, offset = 0x4, fixed_abs, tag = 'smem constant byte address 0x4 - core index']
  #allocation1 [shape = 'u32[72,128]{1,0:T(1,128)}', space=vmem, size = 0x9000, scoped, tag = 'internal scratch']
  %s0 = inlined_call_operand.hbm [shape: f32[8,128], index: 0, kind: input, shape index: {}]
  %s1 = inlined_call_operand.hbm [shape: f32[8,128], index: 1, kind: output, shape index: {}]
  %s2 = sld [smem:[#allocation0]]
  $region18: #{tpu_custom_call.1} parent=0
    _
  %s4 = ssub.s32 1, %s2
  %s5 = scalar_select 0, %s4, %s2
  $region1: #{tpu_custom_call.1} parent=0
    #allocation2 [shape = 'u8[4096]{0}', space=vmem, size = 0x1000, scoped, tag = 'input window, operand 0, single buffered']
    #allocation3 [shape = 's32[1]{0}', space=sflag, size = 0x4, scoped, tag = 'scoped memory for tpu_custom_call.1']
    #allocation4 [shape = 's32[1]{0}', space=sflag, size = 0x4, scoped, tag = 'scoped memory for tpu_custom_call.1']
    #allocation5 [shape = 'u8[4096]{0}', space=vmem, size = 0x1000, scoped, tag = 'output window, operand 0, single buffered']
    %6 = vsyncpa [#allocation3], 0
    %7 = vsyncpa [#allocation4], 0
    // Predicated region
    $region2: #{tpu_custom_call.1} parent=1 // pred_check
      _
    $region3: #{tpu_custom_call.1} parent=1 // pred_check_branch
      %9 = sbr.rel (0) target = $region5
    $region4: #{tpu_custom_call.1} parent=1 // pred_region
      %11 = vsyncadd [#allocation3], 0
      %s13 = sshll.u32 %s0, 4
      %s14 = int_to_ptr.hbm [resolvable:$true] %s13
      %s15 = sshll.u32 [#allocation2], 4
      %s16 = int_to_ptr.vmem [resolvable:$true] %s15
      %18 = dma.hbm_to_vmem [thread:$0]  %s14, 128, %s16, [#allocation3]
    $region5: #{tpu_custom_call.1} parent=1 // pred_fallthru
      _
    // Predicated region
    $region6: #{tpu_custom_call.1} parent=1 // pred_check
      _
    $region7: #{tpu_custom_call.1} parent=1 // pred_check_branch
      %20 = sbr.rel (0) target = $region9
    $region8: #{tpu_custom_call.1} parent=1 // pred_region
      %22 = dma.done [#allocation3], 128
    $region9: #{tpu_custom_call.1} parent=1 // pred_fallthru
      _
    %v23 = vld [vmem:[#allocation2] sm:$0xff]
    %24 = vrot.lane.b32.xlu0 %v23, 1
    %v25 = vpop.permute.xlu0 %24
    %26 = vst [vmem:[#allocation5] sm:$0xff] %v25
    // Predicated region
    $region10: #{tpu_custom_call.1} parent=1 // pred_check
      _
    $region11: #{tpu_custom_call.1} parent=1 // pred_check_branch
      %28 = sbr.rel (0) target = $region13
    $region12: #{tpu_custom_call.1} parent=1 // pred_region
      %30 = vsyncadd [#allocation4], 0
      %s32 = sshll.u32 [#allocation5], 4
      %s33 = int_to_ptr.vmem [resolvable:$true] %s32
      %s34 = sshll.u32 %s1, 4
      %s35 = int_to_ptr.hbm [resolvable:$true] %s34
      %37 = dma.vmem_to_hbm [thread:$0]  %s33, 128, %s35, [#allocation4]
    $region13: #{tpu_custom_call.1} parent=1 // pred_fallthru
      _
    // Predicated region
    $region14: #{tpu_custom_call.1} parent=1 // pred_check
      _
    $region15: #{tpu_custom_call.1} parent=1 // pred_check_branch
      %39 = sbr.rel (0) target = $region17
    $region16: #{tpu_custom_call.1} parent=1 // pred_region
      %41 = dma.done [#allocation4], 128
    $region17: #{tpu_custom_call.1} parent=1 // pred_fallthru
      _
    %42 = vsyncpa [#allocation3], 1
    %43 = vsyncpa [#allocation4], 1

</llo_original>
